<compile_context>
chip_gen: v5e
topology: v5e:2x2
jax: 0.10.0
libtpu: 0.0.40
codegen_flags: <defaults>
</compile_context>

<pallas_src>
import functools

import jax
import jax.numpy as jnp
from jax.experimental import pallas as pl
from jax.experimental.pallas import tpu as pltpu

EPS = 1e-6


# --------------------------------------------------------------------------- #
# Planning helpers (trace-time Python)
# --------------------------------------------------------------------------- #
def _round_up(a, m):
    return ((a + m - 1) // m) * m


@functools.lru_cache(maxsize=1)
def _vmem_capacity_bytes():
    try:
        return int(pltpu.get_tpu_info().vmem_capacity_bytes)
    except Exception:  # interpret mode / old jax: assume a 128 MiB-VMEM part.
        return 128 * 1024 * 1024


def _spec(block_shape, index_map, buffers=None):
    """BlockSpec with optional explicit buffer count (single-buffer invariants).

    Falls back to a plain BlockSpec if this jax version has no pipeline_mode.
    """
    if buffers is not None:
        try:
            return pl.BlockSpec(
                block_shape, index_map, pipeline_mode=pl.Buffered(buffers)
            )
        except Exception:
            pass
    return pl.BlockSpec(block_shape, index_map)


# --------------------------------------------------------------------------- #
# Kernels
# --------------------------------------------------------------------------- #
def _layer_norm(x_f32, a2_ref, b2_ref, eps):
    # PyTorch-module semantics: unbiased std, (std + eps) in the denominator.
    d = x_f32.shape[-1]
    mean = jnp.mean(x_f32, axis=-1, keepdims=True)
    diff = x_f32 - mean
    var_unbiased = jnp.sum(diff * diff, axis=-1, keepdims=True) * (1.0 / (d - 1))
    # Per-row reciprocal on the EUP instead of a per-element divide.
    inv_std = pl.reciprocal(jnp.sqrt(var_unbiased) + eps, approx=True)
    return (diff * inv_std) * a2_ref[...].astype(jnp.float32) + b2_ref[...].astype(
        jnp.float32
    )


def _kernel_full(x_ref, a2_ref, b2_ref, w_ref, wb_ref, o_ref, *, eps):
    # Weight fully resident (single-buffered); 1-D "parallel" grid over row tiles.
    x = x_ref[...].astype(jnp.float32)
    normed = _layer_norm(x, a2_ref, b2_ref, eps)
    w = w_ref[...]
    y = jnp.dot(normed.astype(w.dtype), w, preferred_element_type=jnp.float32)
    y = y + wb_ref[...].astype(jnp.float32)
    # dropout: eval/inference mode => identity.
    # TODO(synk): training-mode dropout not implemented.
    o_ref[...] = (x + y).astype(o_ref.dtype)


def _kernel_ntiled(x_ref, a2_ref, b2_ref, w_ref, wb_ref, o_ref, *, eps, tile_n):
    # Grid = (N outer, row tiles inner): each weight column-block is fetched from
    # HBM exactly once; LayerNorm is recomputed per step (hides under the MXU).
    x = x_ref[...].astype(jnp.float32)
    normed = _layer_norm(x, a2_ref, b2_ref, eps)
    w = w_ref[...]
    y = jnp.dot(normed.astype(w.dtype), w, preferred_element_type=jnp.float32)
    y = y + wb_ref[...].astype(jnp.float32)
    # Residual columns sliced from the already-resident full-D x block
    # (128-aligned, so no extra HBM read and no VMEM re-layout copy).
    col0 = pl.multiple_of(pl.program_id(0) * tile_n, 128)
    x_cols = x_ref[:, pl.ds(col0, tile_n)].astype(jnp.float32)
    o_ref[...] = (x_cols + y).astype(o_ref.dtype)


# --------------------------------------------------------------------------- #
# pallas_call wrapper
# --------------------------------------------------------------------------- #
@functools.partial(
    jax.jit, static_argnames=("tr", "tile_n", "vmem_limit", "single_buffer")
)
def _impl(x2, a2r, b2r, w, wbr, *, tr, tile_n, vmem_limit, single_buffer):
    rows, D = x2.shape
    n_tiles = D // tile_n
    grid_rows = pl.cdiv(rows, tr)  # ragged final block; no wrapper-side padding
    inv = 1 if single_buffer else None  # single-buffer grid-invariant operands

    if n_tiles == 1:
        kernel = functools.partial(_kernel_full, eps=EPS)
        grid = (grid_rows,)
        in_specs = [
            pl.BlockSpec((tr, D), lambda i: (i, 0)),       # x rows
            _spec((1, D), lambda i: (0, 0), buffers=inv),  # a_2   (invariant)
            _spec((1, D), lambda i: (0, 0), buffers=inv),  # b_2   (invariant)
            _spec((D, D), lambda i: (0, 0), buffers=inv),  # weight (invariant, resident)
            _spec((1, D), lambda i: (0, 0), buffers=inv),  # bias  (invariant)
        ]
        out_specs = pl.BlockSpec((tr, D), lambda i: (i, 0))
        dims = ("parallel",)
    else:
        kernel = functools.partial(_kernel_ntiled, eps=EPS, tile_n=tile_n)
        grid = (n_tiles, grid_rows)  # N outer: weight block fetched once per N value
        in_specs = [
            pl.BlockSpec((tr, D), lambda n, i: (i, 0)),        # x (full D: LN + residual slice)
            _spec((1, D), lambda n, i: (0, 0), buffers=inv),   # a_2 (invariant)
            _spec((1, D), lambda n, i: (0, 0), buffers=inv),   # b_2 (invariant)
            pl.BlockSpec((D, tile_n), lambda n, i: (0, n)),    # weight column block
            pl.BlockSpec((1, tile_n), lambda n, i: (0, n)),    # bias column block
        ]
        out_specs = pl.BlockSpec((tr, tile_n), lambda n, i: (i, n))
        dims = ("parallel", "arbitrary")  # N axis is fully parallel (megacore)

    return pl.pallas_call(
        kernel,
        out_shape=jax.ShapeDtypeStruct((rows, D), x2.dtype),
        grid=grid,
        in_specs=in_specs,
        out_specs=out_specs,
        compiler_params=pltpu.CompilerParams(
            dimension_semantics=dims,
            vmem_limit_bytes=vmem_limit,
        ),
    )(x2, a2r, b2r, w, wbr)


_SINGLE_BUFFER_OK = [True]


def residual_connection(x, a2, b2, w, wb, *, tile_rows=None, tile_n_cap=None):
    """x: [B, S, D]; a2, b2, wb: [D]; w: [D, D]. Returns [B, S, D].

    bf16 weights are the fast path (native bf16 MXU operands, f32 accumulation);
    f32 weights work but run the MXU / HBM at half rate.
    """
    B, S, D = x.shape
    rows = B * S
    itemsize = jnp.dtype(x.dtype).itemsize
    gran = 8 if itemsize >= 4 else 16  # sublane granularity (f32: 8, bf16: 16)

    cap = _vmem_capacity_bytes()
    vmem_limit = int(cap * 0.85)  # ~54 MiB on v7x (64 MiB), ~108 MiB on v5e/v6e (128 MiB)

    if tile_rows is None:
        tile_rows = 512 if cap >= (100 << 20) else 256

    # Row tile: as large as requested, but keep >= 2 row tiles when possible so
    # the "parallel" axis can be sharded across both v7x TensorCores.
    rows_g = _round_up(rows, gran)
    tr = min(tile_rows, rows_g)
    if rows_g > gran:
        tr = min(tr, max(gran, _round_up(-(-rows // 2), gran)))
    tr = _round_up(tr, gran)

    # N (output-column) tiling of the (D, D) weight: only when the resident
    # weight would not fit the VMEM budget. Blocks stay lane-dense (x128).
    w_itemsize = jnp.dtype(w.dtype).itemsize
    if tile_n_cap is None:
        if D * D * w_itemsize <= vmem_limit // 2:
            tile_n_cap = D  # whole weight resident; no N-tiling
        else:
            tile_n_cap = max(128, ((vmem_limit // 4) // (D * w_itemsize)) // 128 * 128)
    tile_n = D
    if D > tile_n_cap and D % 128 == 0:
        tile_n = max(128, (int(tile_n_cap) // 128) * 128)
        while D % tile_n != 0:
            tile_n -= 128

    x2 = x.reshape(rows, D)
    args = (x2, a2.reshape(1, D), b2.reshape(1, D), w, wb.reshape(1, D))
    kw = dict(tr=int(tr), tile_n=int(tile_n), vmem_limit=int(vmem_limit))

    # Prefer single-buffered invariant operands; gracefully fall back if this
    # jax/libtpu combination rejects pl.Buffered(1) at lowering time.
    if _SINGLE_BUFFER_OK[0]:
        try:
            out = _impl(*args, single_buffer=True, **kw)
        except Exception:
            _SINGLE_BUFFER_OK[0] = False
            out = _impl(*args, single_buffer=False, **kw)
    else:
        out = _impl(*args, single_buffer=False, **kw)
    return out.reshape(B, S, D)


# --------------------------------------------------------------------------- #
# Reference + tests
# --------------------------------------------------------------------------- #
def _reference(x, a2, b2, w, wb):
    xf = x.astype(jnp.float32)
    d = x.shape[-1]
    mean = jnp.mean(xf, axis=-1, keepdims=True)
    diff = xf - mean
    std = jnp.sqrt(jnp.sum(diff * diff, axis=-1, keepdims=True) / (d - 1))
    normed = a2 * diff / (std + EPS) + b2
    y = normed @ w.astype(jnp.float32) + wb.astype(jnp.float32)
    return (xf + y).astype(x.dtype)


def _check(out, ref, atol, rtol, name):
    ok = jnp.allclose(
        out.astype(jnp.float32), ref.astype(jnp.float32), atol=atol, rtol=rtol
    )
    assert ok, f"mismatch vs reference ({name})"


if __name__ == "__main__":
    key = jax.random.PRNGKey(0)

    # ---- Case 1: f32, lane-dense D=128 (weight-resident path, 2 row tiles) ----
    B, S, D = 2, 8, 128
    k_x, k_w, k_b = jax.random.split(key, 3)
    x = jax.random.normal(k_x, (B, S, D), dtype=jnp.float32)
    a2 = jnp.ones((D,), dtype=jnp.float32)
    b2 = jnp.zeros((D,), dtype=jnp.float32)
    w = jax.random.normal(k_w, (D, D), dtype=jnp.float32) * (1.0 / jnp.sqrt(D))
    wb = jax.random.normal(k_b, (D,), dtype=jnp.float32) * 0.01

    out = jax.block_until_ready(residual_connection(x, a2, b2, w, wb))
    assert out.shape == (B, S, D)
    _check(out, _reference(x, a2, b2, w, wb), 1e-2, 1e-2, "f32")

    # ---- Case 2: bf16 activations/weights (bf16 MXU operands, f32 accumulation) ----
    xb = x.astype(jnp.bfloat16)
    wbf = w.astype(jnp.bfloat16)
    wbb = wb.astype(jnp.bfloat16)
    out_bf = jax.block_until_ready(residual_connection(xb, a2, b2, wbf, wbb))
    assert out_bf.dtype == jnp.bfloat16
    _check(out_bf, _reference(xb, a2, b2, wbf, wbb), 5e-2, 5e-2, "bf16")

    # ---- Case 3: N-tiled weight path (D=256 in 128-col blocks, N-outer grid) ----
    D2 = 256
    k_x2, k_w2, k_b2 = jax.random.split(jax.random.PRNGKey(1), 3)
    x2 = jax.random.normal(k_x2, (B, S, D2), dtype=jnp.float32)
    a22 = jnp.ones((D2,), dtype=jnp.float32)
    b22 = jnp.zeros((D2,), dtype=jnp.float32)
    w2 = jax.random.normal(k_w2, (D2, D2), dtype=jnp.float32) * (1.0 / jnp.sqrt(D2))
    wb2 = jax.random.normal(k_b2, (D2,), dtype=jnp.float32) * 0.01
    out2 = jax.block_until_ready(
        residual_connection(x2, a22, b22, w2, wb2, tile_n_cap=128)
    )
    assert out2.shape == (B, S, D2)
    _check(out2, _reference(x2, a22, b22, w2, wb2), 1e-2, 1e-2, "f32 N-tiled")

    # ---- Case 4: ragged row count (B*S not a multiple of the row tile) ----
    B3, S3 = 3, 5
    k_x3 = jax.random.PRNGKey(2)
    x3 = jax.random.normal(k_x3, (B3, S3, D), dtype=jnp.float32)
    out3 = jax.block_until_ready(residual_connection(x3, a2, b2, w, wb))
    assert out3.shape == (B3, S3, D)
    _check(out3, _reference(x3, a2, b2, w, wb), 1e-2, 1e-2, "f32 ragged rows")

    print("KERNEL_OK")
</pallas_src>

<mosaic_0001>
module attributes {stable_mosaic.version = 11 : i64} {
  func.func @_kernel_full(%arg0: i32, %arg1: memref<8x128xf32, #tpu.memory_space<vmem>>, %arg2: memref<1x128xf32, #tpu.memory_space<vmem>>, %arg3: memref<1x128xf32, #tpu.memory_space<vmem>>, %arg4: memref<128x128xf32, #tpu.memory_space<vmem>>, %arg5: memref<1x128xf32, #tpu.memory_space<vmem>>, %arg6: memref<8x128xf32, #tpu.memory_space<vmem>>) attributes {dimension_semantics = [#tpu.dimension_semantics<parallel>], iteration_bounds = array<i64: 2>, scalar_prefetch = 0 : i64, scratch_operands = 0 : i64, tpu.core_type = #tpu.core_type<tc>, window_params = [{transform_indices = @transform_0, window_bounds = array<i64: 8, 128>}, {pipeline_mode = #tpu.pipeline_mode<synchronous>, transform_indices = @transform_1, window_bounds = array<i64: 1, 128>}, {pipeline_mode = #tpu.pipeline_mode<synchronous>, transform_indices = @transform_2, window_bounds = array<i64: 1, 128>}, {pipeline_mode = #tpu.pipeline_mode<synchronous>, transform_indices = @transform_3, window_bounds = array<i64: 128, 128>}, {pipeline_mode = #tpu.pipeline_mode<synchronous>, transform_indices = @transform_4, window_bounds = array<i64: 1, 128>}, {transform_indices = @transform_5, window_bounds = array<i64: 8, 128>}]} {
    %c0 = arith.constant 0 : index
    %c0_0 = arith.constant 0 : index
    %0 = vector.load %arg1[%c0, %c0_0] : memref<8x128xf32, #tpu.memory_space<vmem>>, vector<8x128xf32>
    %cst = arith.constant dense<0.000000e+00> : vector<8xf32>
    %1 = vector.multi_reduction <add>, %0, %cst [1] : vector<8x128xf32> to vector<8xf32>
    %2 = vector.shape_cast %1 : vector<8xf32> to vector<8x1xf32>
    %cst_1 = arith.constant 1.280000e+02 : f32
    %3 = vector.broadcast %cst_1 : f32 to vector<8x1xf32>
    %4 = arith.divf %2, %3 : vector<8x1xf32>
    %5 = vector.broadcast %4 : vector<8x1xf32> to vector<8x128xf32>
    %6 = arith.subf %0, %5 : vector<8x128xf32>
    %7 = arith.mulf %6, %6 : vector<8x128xf32>
    %cst_2 = arith.constant dense<0.000000e+00> : vector<8xf32>
    %8 = vector.multi_reduction <add>, %7, %cst_2 [1] : vector<8x128xf32> to vector<8xf32>
    %9 = vector.shape_cast %8 : vector<8xf32> to vector<8x1xf32>
    %cst_3 = arith.constant 0.00787401571 : f32
    %10 = vector.broadcast %cst_3 : f32 to vector<8x1xf32>
    %11 = arith.mulf %9, %10 : vector<8x1xf32>
    %12 = math.sqrt %11 : vector<8x1xf32>
    %cst_4 = arith.constant 9.99999997E-7 : f32
    %13 = vector.broadcast %cst_4 : f32 to vector<8x1xf32>
    %14 = arith.addf %12, %13 : vector<8x1xf32>
    %15 = tpu.reciprocal %14 {approx = true} : vector<8x1xf32> -> vector<8x1xf32>
    %16 = vector.broadcast %15 : vector<8x1xf32> to vector<8x128xf32>
    %17 = arith.mulf %6, %16 : vector<8x128xf32>
    %c0_5 = arith.constant 0 : index
    %c0_6 = arith.constant 0 : index
    %18 = vector.load %arg2[%c0_5, %c0_6] : memref<1x128xf32, #tpu.memory_space<vmem>>, vector<1x128xf32>
    %19 = vector.broadcast %18 : vector<1x128xf32> to vector<8x128xf32>
    %20 = arith.mulf %17, %19 : vector<8x128xf32>
    %c0_7 = arith.constant 0 : index
    %c0_8 = arith.constant 0 : index
    %21 = vector.load %arg3[%c0_7, %c0_8] : memref<1x128xf32, #tpu.memory_space<vmem>>, vector<1x128xf32>
    %22 = vector.broadcast %21 : vector<1x128xf32> to vector<8x128xf32>
    %23 = arith.addf %20, %22 : vector<8x128xf32>
    %c0_9 = arith.constant 0 : index
    %c0_10 = arith.constant 0 : index
    %24 = vector.load %arg4[%c0_9, %c0_10] : memref<128x128xf32, #tpu.memory_space<vmem>>, vector<128x128xf32>
    %cst_11 = arith.constant dense<0.000000e+00> : vector<8x128xf32>
    %25 = tpu.matmul %23, %24, %cst_11 {dimension_numbers = #tpu.dot_dimension_numbers<[1], [0], [0], [1], [0, 0, 1, 1], [], []>} : vector<8x128xf32>, vector<128x128xf32>, vector<8x128xf32> -> vector<8x128xf32>
    %c0_12 = arith.constant 0 : index
    %c0_13 = arith.constant 0 : index
    %26 = vector.load %arg5[%c0_12, %c0_13] : memref<1x128xf32, #tpu.memory_space<vmem>>, vector<1x128xf32>
    %27 = vector.broadcast %26 : vector<1x128xf32> to vector<8x128xf32>
    %28 = arith.addf %25, %27 : vector<8x128xf32>
    %29 = arith.addf %0, %28 : vector<8x128xf32>
    %c0_14 = arith.constant 0 : index
    %c0_15 = arith.constant 0 : index
    %30 = vector.load %arg6[%c0_14, %c0_15] : memref<8x128xf32, #tpu.memory_space<vmem>>, vector<8x128xf32>
    tpu.vector_store %arg6[%c0_14, %c0_15], %29 {strides = array<i32>} : memref<8x128xf32, #tpu.memory_space<vmem>>, vector<8x128xf32>,
    return
  }
  func.func @transform_0(%arg0: i32) -> (i32, i32) {
    %c0_i32 = arith.constant 0 : i32
    %c0_i32_0 = arith.constant 0 : i32
    return %arg0, %c0_i32 : i32, i32
  }
  func.func @transform_1(%arg0: i32) -> (i32, i32) {
    %c0_i32 = arith.constant 0 : i32
    %c0_i32_0 = arith.constant 0 : i32
    %c0_i32_1 = arith.constant 0 : i32
    return %c0_i32, %c0_i32_0 : i32, i32
  }
  func.func @transform_2(%arg0: i32) -> (i32, i32) {
    %c0_i32 = arith.constant 0 : i32
    %c0_i32_0 = arith.constant 0 : i32
    %c0_i32_1 = arith.constant 0 : i32
    return %c0_i32, %c0_i32_0 : i32, i32
  }
  func.func @transform_3(%arg0: i32) -> (i32, i32) {
    %c0_i32 = arith.constant 0 : i32
    %c0_i32_0 = arith.constant 0 : i32
    %c0_i32_1 = arith.constant 0 : i32
    return %c0_i32, %c0_i32_0 : i32, i32
  }
  func.func @transform_4(%arg0: i32) -> (i32, i32) {
    %c0_i32 = arith.constant 0 : i32
    %c0_i32_0 = arith.constant 0 : i32
    %c0_i32_1 = arith.constant 0 : i32
    return %c0_i32, %c0_i32_0 : i32, i32
  }
  func.func @transform_5(%arg0: i32) -> (i32, i32) {
    %c0_i32 = arith.constant 0 : i32
    %c0_i32_0 = arith.constant 0 : i32
    return %arg0, %c0_i32 : i32, i32
  }
}

module attributes {stable_mosaic.version = 11 : i64} {
  func.func @_kernel_full(%arg0: i32, %arg1: memref<8x128xf32, #tpu.memory_space<vmem>>, %arg2: memref<1x128xf32, #tpu.memory_space<vmem>>, %arg3: memref<1x128xf32, #tpu.memory_space<vmem>>, %arg4: memref<128x128xf32, #tpu.memory_space<vmem>>, %arg5: memref<1x128xf32, #tpu.memory_space<vmem>>, %arg6: memref<8x128xf32, #tpu.memory_space<vmem>>) attributes {dimension_semantics = [#tpu.dimension_semantics<parallel>], iteration_bounds = array<i64: 2>, scalar_prefetch = 0 : i64, scratch_operands = 0 : i64, tpu.core_type = #tpu.core_type<tc>, window_params = [{transform_indices = @transform_0, window_bounds = array<i64: 8, 128>}, {pipeline_mode = #tpu.pipeline_mode<synchronous>, transform_indices = @transform_1, window_bounds = array<i64: 1, 128>}, {pipeline_mode = #tpu.pipeline_mode<synchronous>, transform_indices = @transform_2, window_bounds = array<i64: 1, 128>}, {pipeline_mode = #tpu.pipeline_mode<synchronous>, transform_indices = @transform_3, window_bounds = array<i64: 128, 128>}, {pipeline_mode = #tpu.pipeline_mode<synchronous>, transform_indices = @transform_4, window_bounds = array<i64: 1, 128>}, {transform_indices = @transform_5, window_bounds = array<i64: 8, 128>}]} {
    %c0 = arith.constant 0 : index
    %c0_0 = arith.constant 0 : index
    %0 = vector.load %arg1[%c0, %c0_0] : memref<8x128xf32, #tpu.memory_space<vmem>>, vector<8x128xf32>
    %cst = arith.constant dense<0.000000e+00> : vector<8xf32>
    %1 = vector.multi_reduction <add>, %0, %cst [1] : vector<8x128xf32> to vector<8xf32>
    %2 = vector.shape_cast %1 : vector<8xf32> to vector<8x1xf32>
    %cst_1 = arith.constant 1.280000e+02 : f32
    %3 = vector.broadcast %cst_1 : f32 to vector<8x1xf32>
    %4 = arith.divf %2, %3 : vector<8x1xf32>
    %5 = vector.broadcast %4 : vector<8x1xf32> to vector<8x128xf32>
    %6 = arith.subf %0, %5 : vector<8x128xf32>
    %7 = arith.mulf %6, %6 : vector<8x128xf32>
    %cst_2 = arith.constant dense<0.000000e+00> : vector<8xf32>
    %8 = vector.multi_reduction <add>, %7, %cst_2 [1] : vector<8x128xf32> to vector<8xf32>
    %9 = vector.shape_cast %8 : vector<8xf32> to vector<8x1xf32>
    %cst_3 = arith.constant 0.00787401571 : f32
    %10 = vector.broadcast %cst_3 : f32 to vector<8x1xf32>
    %11 = arith.mulf %9, %10 : vector<8x1xf32>
    %12 = math.sqrt %11 : vector<8x1xf32>
    %cst_4 = arith.constant 9.99999997E-7 : f32
    %13 = vector.broadcast %cst_4 : f32 to vector<8x1xf32>
    %14 = arith.addf %12, %13 : vector<8x1xf32>
    %15 = tpu.reciprocal %14 {approx = true} : vector<8x1xf32> -> vector<8x1xf32>
    %16 = vector.broadcast %15 : vector<8x1xf32> to vector<8x128xf32>
    %17 = arith.mulf %6, %16 : vector<8x128xf32>
    %c0_5 = arith.constant 0 : index
    %c0_6 = arith.constant 0 : index
    %18 = vector.load %arg2[%c0_5, %c0_6] : memref<1x128xf32, #tpu.memory_space<vmem>>, vector<1x128xf32>
    %19 = vector.broadcast %18 : vector<1x128xf32> to vector<8x128xf32>
    %20 = arith.mulf %17, %19 : vector<8x128xf32>
    %c0_7 = arith.constant 0 : index
    %c0_8 = arith.constant 0 : index
    %21 = vector.load %arg3[%c0_7, %c0_8] : memref<1x128xf32, #tpu.memory_space<vmem>>, vector<1x128xf32>
    %22 = vector.broadcast %21 : vector<1x128xf32> to vector<8x128xf32>
    %23 = arith.addf %20, %22 : vector<8x128xf32>
    %c0_9 = arith.constant 0 : index
    %c0_10 = arith.constant 0 : index
    %24 = vector.load %arg4[%c0_9, %c0_10] : memref<128x128xf32, #tpu.memory_space<vmem>>, vector<128x128xf32>
    %cst_11 = arith.constant dense<0.000000e+00> : vector<8x128xf32>
    %25 = tpu.matmul %23, %24, %cst_11 {dimension_numbers = #tpu.dot_dimension_numbers<[1], [0], [0], [1], [0, 0, 1, 1], [], []>} : vector<8x128xf32>, vector<128x128xf32>, vector<8x128xf32> -> vector<8x128xf32>
    %c0_12 = arith.constant 0 : index
    %c0_13 = arith.constant 0 : index
    %26 = vector.load %arg5[%c0_12, %c0_13] : memref<1x128xf32, #tpu.memory_space<vmem>>, vector<1x128xf32>
    %27 = vector.broadcast %26 : vector<1x128xf32> to vector<8x128xf32>
    %28 = arith.addf %25, %27 : vector<8x128xf32>
    %29 = arith.addf %0, %28 : vector<8x128xf32>
    %c0_14 = arith.constant 0 : index
    %c0_15 = arith.constant 0 : index
    %30 = vector.load %arg6[%c0_14, %c0_15] : memref<8x128xf32, #tpu.memory_space<vmem>>, vector<8x128xf32>
    tpu.vector_store %arg6[%c0_14, %c0_15], %29 {strides = array<i32>} : memref<8x128xf32, #tpu.memory_space<vmem>>, vector<8x128xf32>,
    return
  }
  func.func @transform_0(%arg0: i32) -> (i32, i32) {
    %c0_i32 = arith.constant 0 : i32
    %c0_i32_0 = arith.constant 0 : i32
    return %arg0, %c0_i32 : i32, i32
  }
  func.func @transform_1(%arg0: i32) -> (i32, i32) {
    %c0_i32 = arith.constant 0 : i32
    %c0_i32_0 = arith.constant 0 : i32
    %c0_i32_1 = arith.constant 0 : i32
    return %c0_i32, %c0_i32_0 : i32, i32
  }
  func.func @transform_2(%arg0: i32) -> (i32, i32) {
    %c0_i32 = arith.constant 0 : i32
    %c0_i32_0 = arith.constant 0 : i32
    %c0_i32_1 = arith.constant 0 : i32
    return %c0_i32, %c0_i32_0 : i32, i32
  }
  func.func @transform_3(%arg0: i32) -> (i32, i32) {
    %c0_i32 = arith.constant 0 : i32
    %c0_i32_0 = arith.constant 0 : i32
    %c0_i32_1 = arith.constant 0 : i32
    return %c0_i32, %c0_i32_0 : i32, i32
  }
  func.func @transform_4(%arg0: i32) -> (i32, i32) {
    %c0_i32 = arith.constant 0 : i32
    %c0_i32_0 = arith.constant 0 : i32
    %c0_i32_1 = arith.constant 0 : i32
    return %c0_i32, %c0_i32_0 : i32, i32
  }
  func.func @transform_5(%arg0: i32) -> (i32, i32) {
    %c0_i32 = arith.constant 0 : i32
    %c0_i32_0 = arith.constant 0 : i32
    return %arg0, %c0_i32 : i32, i32
  }
}

</mosaic_0001>

<llo_original>
// kernel: _impl.1
$region0: #{_impl.1}
  #allocation0 [shape = 'u32[]', space=smem, size = 0x4, offset = 0x4, fixed_abs, tag = 'smem constant byte address 0x4 - core index']
  #allocation1 [shape = 'u32[72,128]{1,0:T(1,128)}', space=vmem, size = 0x9000, scoped, tag = 'internal scratch']
  %s0 = inlined_call_operand.hbm [shape: f32[16,128], index: 0, kind: input, shape index: {}]
  %s1 = inlined_call_operand.hbm [shape: f32[1,128], index: 1, kind: input, shape index: {}]
  %s2 = inlined_call_operand.vmem [shape: f32[1,128], index: 2, kind: input, shape index: {}]
  %s3 = inlined_call_operand.hbm [shape: f32[128,128], index: 3, kind: input, shape index: {}]
  %s4 = inlined_call_operand.vmem [shape: f32[1,128], index: 4, kind: input, shape index: {}]
  %s5 = inlined_call_operand.hbm [shape: f32[16,128], index: 5, kind: output, shape index: {}]
  %s6 = sld [smem:[#allocation0]]
  $region65: #{_impl.1} parent=0
    _
  %s8 = ssub.s32 1, %s6
  %s9 = scalar_select 0, %s8, %s6
  $region1: #{_impl.1} parent=0
    #allocation2 [shape = 'u8[8192]{0}', space=vmem, size = 0x2000, scoped, tag = 'input window, operand 0']
    #allocation3 [shape = 's32[2]{0}', space=sflag, size = 0x8, scoped, tag = 'scoped memory for _impl.1']
    #allocation4 [shape = 's32[2]{0}', space=sflag, size = 0x8, scoped, tag = 'scoped memory for _impl.1']
    #allocation5 [shape = 'u8[512]{0}', space=vmem, size = 0x400, scoped, tag = 'input window, operand 1, single buffered']
    #allocation6 [shape = 's32[1]{0}', space=sflag, size = 0x4, scoped, tag = 'scoped memory for _impl.1']
    #allocation7 [shape = 'u8[65536]{0}', space=vmem, size = 0x10000, scoped, tag = 'input window, operand 3, single buffered']
    #allocation8 [shape = 'u8[8192]{0}', space=vmem, size = 0x2000, scoped, tag = 'output window, operand 0']
    %10 = vsyncpa [#allocation3], 0
    %s11 = scalar_lea.sflag [#allocation3], 1
    %12 = vsyncpa %s11, 0
    %13 = vsyncpa [#allocation6], 0
    %14 = vsyncpa [#allocation4], 0
    %s15 = scalar_lea.sflag [#allocation4], 1
    %16 = vsyncpa %s15, 0
    loop: start=0, step=1, limit=4
    $region2: #{_impl.1} parent=1 // loop_pre_header
      _
    $region3: #{_impl.1} parent=1 // loop_header
      %s18 = sphi 0, %s22
      %p19 = scmp.ge.s32.totalorder %s18, 4
      %s28 = sphi 0, %s30
      %s31 = sphi 0, %s28
      %s32 = sphi 0, %s31
      %s48 = sphi 0, %s32
      %s52 = sphi 0, %s52
      %s54 = sphi 0, %s52
      %s55 = sphi 0, %s54
      %s69 = sphi 0, %s55
      %s73 = sphi 0, %s73
      %s75 = sphi 0, %s73
      %s76 = sphi 0, %s75
      %s90 = sphi 0, %s76
      %s94 = sphi 0, %s94
      %s96 = sphi 0, %s94
      %s97 = sphi 0, %s96
      %s111 = sphi 0, %s97
      %s115 = sphi 0, %s115
      %s117 = sphi 0, %s115
      %s118 = sphi 0, %s117
      %s132 = sphi 0, %s118
      %s138 = sphi 0, %s140
      %s141 = sphi 0, %s138
      %s142 = sphi 0, %s141
      %s158 = sphi 0, %s142
    $region4: #{_impl.1} parent=1 // loop_header_branch
      %21 = sbr.rel (%p19) target = $region8
    $region5: #{_impl.1} parent=1 // loop_body
      %s23 = ssub.s32 %s18, 1
      %s24 = ssub.s32 %s18, 2
      %s25 = sadd.s32 %s18, 1
      %s26 = ssub.s32 %s18, %s25
      %p27 = scmp.eq.s32.totalorder %s26, 0
      %s29 = sadd.s32 %s28, 1
      %s30 = scalar_select %p27, %s28, %s29
      %p33 = pneg %p27
      %p34 = scmp.eq.s32.totalorder %s18, 1
      %p35 = por %p33, %p34
      %p36 = scmp.ne.s32.totalorder %s28, %s31
      %p37 = scmp.eq.s32.totalorder %s18, 0
      %p38 = por %p36, %p37
      %p39 = scmp.ne.s32.totalorder %s28, %s31
      %p40 = scmp.eq.s32.totalorder %s23, 1
      %p41 = por %p39, %p40
      %p42 = scmp.ne.s32.totalorder %s31, %s32
      %p43 = scmp.eq.s32.totalorder %s23, 0
      %p44 = por %p42, %p43
      %p45 = scmp.ne.s32.totalorder %s31, %s32
      %p46 = scmp.eq.s32.totalorder %s24, 1
      %p47 = por %p45, %p46
      %p49 = scmp.ne.s32.totalorder %s32, %s48
      %p50 = scmp.eq.s32.totalorder %s24, 0
      %p51 = por %p49, %p50
      %s53 = sadd.s32 %s52, 1
      %p56 = scmp.eq.s32.totalorder %s18, 1
      %p57 = scmp.ne.s32.totalorder %s52, %s54
      %p58 = scmp.eq.s32.totalorder %s18, 0
      %p59 = por %p57, %p58
      %p60 = scmp.ne.s32.totalorder %s52, %s54
      %p61 = scmp.eq.s32.totalorder %s23, 1
      %p62 = por %p60, %p61
      %p63 = scmp.ne.s32.totalorder %s54, %s55
      %p64 = scmp.eq.s32.totalorder %s23, 0
      %p65 = por %p63, %p64
      %p66 = scmp.ne.s32.totalorder %s54, %s55
      %p67 = scmp.eq.s32.totalorder %s24, 1
      %p68 = por %p66, %p67
      %p70 = scmp.ne.s32.totalorder %s55, %s69
      %p71 = scmp.eq.s32.totalorder %s24, 0
      %p72 = por %p70, %p71
      %s74 = sadd.s32 %s73, 1
      %p77 = scmp.eq.s32.totalorder %s18, 1
      %p78 = scmp.ne.s32.totalorder %s73, %s75
      %p79 = scmp.eq.s32.totalorder %s18, 0
      %p80 = por %p78, %p79
      %p81 = scmp.ne.s32.totalorder %s73, %s75
      %p82 = scmp.eq.s32.totalorder %s23, 1
      %p83 = por %p81, %p82
      %p84 = scmp.ne.s32.totalorder %s75, %s76
      %p85 = scmp.eq.s32.totalorder %s23, 0
      %p86 = por %p84, %p85
      %p87 = scmp.ne.s32.totalorder %s75, %s76
      %p88 = scmp.eq.s32.totalorder %s24, 1
      %p89 = por %p87, %p88
      %p91 = scmp.ne.s32.totalorder %s76, %s90
      %p92 = scmp.eq.s32.totalorder %s24, 0
      %p93 = por %p91, %p92
      %s95 = sadd.s32 %s94, 1
      %p98 = scmp.eq.s32.totalorder %s18, 1
      %p99 = scmp.ne.s32.totalorder %s94, %s96
      %p100 = scmp.eq.s32.totalorder %s18, 0
      %p101 = por %p99, %p100
      %p102 = scmp.ne.s32.totalorder %s94, %s96
      %p103 = scmp.eq.s32.totalorder %s23, 1
      %p104 = por %p102, %p103
      %p105 = scmp.ne.s32.totalorder %s96, %s97
      %p106 = scmp.eq.s32.totalorder %s23, 0
      %p107 = por %p105, %p106
      %p108 = scmp.ne.s32.totalorder %s96, %s97
      %p109 = scmp.eq.s32.totalorder %s24, 1
      %p110 = por %p108, %p109
      %p112 = scmp.ne.s32.totalorder %s97, %s111
      %p113 = scmp.eq.s32.totalorder %s24, 0
      %p114 = por %p112, %p113
      %s116 = sadd.s32 %s115, 1
      %p119 = scmp.eq.s32.totalorder %s18, 1
      %p120 = scmp.ne.s32.totalorder %s115, %s117
      %p121 = scmp.eq.s32.totalorder %s18, 0
      %p122 = por %p120, %p121
      %p123 = scmp.ne.s32.totalorder %s115, %s117
      %p124 = scmp.eq.s32.totalorder %s23, 1
      %p125 = por %p123, %p124
      %p126 = scmp.ne.s32.totalorder %s117, %s118
      %p127 = scmp.eq.s32.totalorder %s23, 0
      %p128 = por %p126, %p127
      %p129 = scmp.ne.s32.totalorder %s117, %s118
      %p130 = scmp.eq.s32.totalorder %s24, 1
      %p131 = por %p129, %p130
      %p133 = scmp.ne.s32.totalorder %s118, %s132
      %p134 = scmp.eq.s32.totalorder %s24, 0
      %p135 = por %p133, %p134
      %s136 = ssub.s32 %s18, %s25
      %p137 = scmp.eq.s32.totalorder %s136, 0
      %s139 = sadd.s32 %s138, 1
      %s140 = scalar_select %p137, %s138, %s139
      %p143 = pneg %p137
      %p144 = scmp.eq.s32.totalorder %s18, 1
      %p145 = por %p143, %p144
      %p146 = scmp.ne.s32.totalorder %s138, %s141
      %p147 = scmp.eq.s32.totalorder %s18, 0
      %p148 = por %p146, %p147
      %p149 = scmp.ne.s32.totalorder %s138, %s141
      %p150 = scmp.eq.s32.totalorder %s23, 1
      %p151 = por %p149, %p150
      %p152 = scmp.ne.s32.totalorder %s141, %s142
      %p153 = scmp.eq.s32.totalorder %s23, 0
      %p154 = por %p152, %p153
      %p155 = scmp.ne.s32.totalorder %s141, %s142
      %p156 = scmp.eq.s32.totalorder %s24, 1
      %p157 = por %p155, %p156
      %p159 = scmp.ne.s32.totalorder %s142, %s158
      %p160 = scmp.eq.s32.totalorder %s24, 0
      %p161 = por %p159, %p160
      %p162 = scmp.le.s32.totalorder 1, %s18
      %p163 = scmp.lt.s32.totalorder %s18, 3
      %p164 = pnand %p162, %p163
      %p165 = pneg %p164
      // Predicated region
      $region9: #{_impl.1} parent=5 // pred_check
        _
      $region10: #{_impl.1} parent=5 // pred_check_branch
        %167 = sbr.rel (%p164) target = $region12
      $region11: #{_impl.1} parent=5 // pred_region
        %s168 = ssub.s32 %s18, 1
        // Predicated region
        $region13: #{_impl.1} parent=11 // pred_check
          %p169 = pneg %p65
        $region14: #{_impl.1} parent=11 // pred_check_branch
          %171 = sbr.rel (%p169) target = $region16
        $region15: #{_impl.1} parent=11 // pred_region
          %173 = vsyncadd [#allocation6], 0
          %s175 = sshll.u32 %s1, 4
          %s176 = int_to_ptr.hbm [resolvable:$true] %s175
          %s177 = sshll.u32 [#allocation5], 4
          %s178 = int_to_ptr.vmem [resolvable:$true] %s177
          %180 = dma.hbm_to_vmem [thread:$0]  %s176, 16, %s178, [#allocation6]
        $region16: #{_impl.1} parent=11 // pred_fallthru
          _
        // Predicated region
        $region17: #{_impl.1} parent=11 // pred_check
          %p181 = pneg %p86
        $region18: #{_impl.1} parent=11 // pred_check_branch
          %183 = sbr.rel (%p181) target = $region20
        $region19: #{_impl.1} parent=11 // pred_region
          _
        $region20: #{_impl.1} parent=11 // pred_fallthru
          _
        // Predicated region
        $region21: #{_impl.1} parent=11 // pred_check
          %p184 = pneg %p107
        $region22: #{_impl.1} parent=11 // pred_check_branch
          %186 = sbr.rel (%p184) target = $region24
        $region23: #{_impl.1} parent=11 // pred_region
          %188 = vsyncadd [#allocation6], 0
          %s189 = sshll.u32 %s3, 4
          %s190 = int_to_ptr.hbm [resolvable:$true] %s189
          %s191 = sshll.u32 [#allocation7], 4
          %s192 = int_to_ptr.vmem [resolvable:$true] %s191
          %197 = dma.hbm_to_vmem [thread:$0]  %s190, 2048, %s192, [#allocation6], 128, 128, 8
        $region24: #{_impl.1} parent=11 // pred_fallthru
          _
        // Predicated region
        $region25: #{_impl.1} parent=11 // pred_check
          %p198 = pneg %p128
        $region26: #{_impl.1} parent=11 // pred_check_branch
          %200 = sbr.rel (%p198) target = $region28
        $region27: #{_impl.1} parent=11 // pred_region
          _
        $region28: #{_impl.1} parent=11 // pred_fallthru
          _
      $region12: #{_impl.1} parent=5 // pred_fallthru
        _
      %p201 = scmp.lt.s32.totalorder %s18, 2
      // Predicated region
      $region29: #{_impl.1} parent=5 // pred_check
        %p202 = pneg %p201
      $region30: #{_impl.1} parent=5 // pred_check_branch
        %204 = sbr.rel (%p202) target = $region32
      $region31: #{_impl.1} parent=5 // pred_region
        // Predicated region
        $region33: #{_impl.1} parent=31 // pred_check
          %p205 = pneg %p38
        $region34: #{_impl.1} parent=31 // pred_check_branch
          %207 = sbr.rel (%p205) target = $region36
        $region35: #{_impl.1} parent=31 // pred_region
          %s208 = sand.u32 %s28, 1
          %s209 = scalar_lea.sflag [#allocation3], %s208
          %s210 = sand.u32 %s28, 1
          %s211 = smul.addr %s210, 8
          %s212 = scalar_lea.vmem [#allocation2], %s211
          %214 = vsyncadd %s209, 0
          %s215 = smul.addr %s18, 8
          %s216 = scalar_lea.hbm %s0, %s215
          %s218 = sshll.u32 %s216, 4
          %s219 = int_to_ptr.hbm [resolvable:$true] %s218
          %s220 = sshll.u32 %s212, 4
          %s221 = int_to_ptr.vmem [resolvable:$true] %s220
          %223 = dma.hbm_to_vmem [thread:$0]  %s219, 128, %s221, %s209
        $region36: #{_impl.1} parent=31 // pred_fallthru
          _
      $region32: #{_impl.1} parent=5 // pred_fallthru
        _
      %p224 = scmp.le.s32.totalorder 1, %s18
      %p225 = scmp.lt.s32.totalorder %s18, 3
      %p226 = pnand %p224, %p225
      %p227 = pneg %p226
      // Predicated region
      $region37: #{_impl.1} parent=5 // pred_check
        _
      $region38: #{_impl.1} parent=5 // pred_check_branch
        %229 = sbr.rel (%p226) target = $region40
      $region39: #{_impl.1} parent=5 // pred_region
        %s230 = ssub.s32 %s18, 1
        %s231 = sand.u32 %s31, 1
        %s232 = scalar_lea.sflag [#allocation3], %s231
        %s233 = sand.u32 %s31, 1
        %s234 = smul.addr %s233, 8
        %s235 = scalar_lea.vmem [#allocation2], %s234
        // Predicated region
        $region41: #{_impl.1} parent=39 // pred_check
          %p236 = pneg %p44
        $region42: #{_impl.1} parent=39 // pred_check_branch
          %238 = sbr.rel (%p236) target = $region44
        $region43: #{_impl.1} parent=39 // pred_region
          %240 = dma.done %s232, 128
        $region44: #{_impl.1} parent=39 // pred_fallthru
          _
        // Predicated region
        $region45: #{_impl.1} parent=39 // pred_check
          %p241 = pneg %p65
        $region46: #{_impl.1} parent=39 // pred_check_branch
          %243 = sbr.rel (%p241) target = $region48
        $region47: #{_impl.1} parent=39 // pred_region
          %245 = dma.done [#allocation6], 16
        $region48: #{_impl.1} parent=39 // pred_fallthru
          _
        // Predicated region
        $region49: #{_impl.1} parent=39 // pred_check
          %p246 = pneg %p107
        $region50: #{_impl.1} parent=39 // pred_check_branch
          %248 = sbr.rel (%p246) target = $region52
        $region51: #{_impl.1} parent=39 // pred_region
          %250 = dma.done [#allocation6], 2048
        $region52: #{_impl.1} parent=39 // pred_fallthru
          _
        %s251 = sand.u32 %s31, 1
        %s252 = scalar_lea.sflag [#allocation3], %s251
        %s253 = sand.u32 %s31, 1
        %s254 = smul.addr %s253, 8
        %s255 = scalar_lea.vmem [#allocation2], %s254
        %p256 = pneg %p44
        %p257 = pneg %p41
        %p258 = pneg %p65
        %p259 = pneg %p62
        %p260 = pneg %p86
        %p261 = pneg %p83
        %p262 = pneg %p107
        %p263 = pneg %p104
        %p264 = pneg %p128
        %p265 = pneg %p125
        %p266 = pneg %p154
        %p267 = pneg %p151
        %s268 = sand.u32 %s141, 1
        %s269 = scalar_lea.sflag [#allocation4], %s268
        %s270 = sand.u32 %s141, 1
        %s271 = smul.addr %s270, 8
        %s272 = scalar_lea.vmem [#allocation8], %s271
        %v273 = vld [vmem:[%s235] sm:$0xff]
        %274 = vadd.xlane.f32.xlu0 %v273
        %v275 = vpop.xlane.xlu0 %274
        %v276 = vrcp.pop 128.0
        %v277 = vmul.f32 128.0, %v276
        %v278 = vsub.f32 1.0, %v277
        %v279 = vmul.f32 %v276, %v278
        %v280 = vadd.f32 %v276, %v279
        %vm281 = vweird.f32 %v276
        %v282 = vsel %vm281, %v276, %v280
        %v283 = vmul.f32 %v275, %v282
        %v284 = vsub.f32 %v273, %v283
        %v285 = vmul.f32 %v284, %v284
        %286 = vadd.xlane.f32.xlu0 %v285
        %v287 = vpop.xlane.xlu0 %286
        %v288 = vmul.f32 %v287, 0.007874016
        %v289 = vrsqrt.pop %v288
        %v290 = vmul.f32 %v289, %v288
        %v291 = vmul.f32 %v290, %v289
        %v292 = vmul.f32 0.5, %v291
        %v293 = vsub.f32 1.5, %v292
        %v294 = vmul.f32 %v289, %v293
        %v295 = vmul.f32 %v288, %v294
        %vm296 = vcmp.eq.f32.partialorder %v288, inf
        %v297 = vsel %vm296, %v288, %v295
        %vm298 = vcmp.eq.f32.partialorder %v288, 0.0
        %v299 = vand.u32 %v288, 2147483648
        %v300 = vsel %vm298, %v299, %v297
        %v301 = vadd.f32 %v300, 1e-06
        %v302 = vrcp.pop %v301
        %v303 = vmul.f32 %v284, %v302
        %v304 = vld [vmem:[#allocation5] sm:$0x1]
        %v306 = vperm.slane %v304, 0
        %v308 = vmul.f32 %v303, %v306
        %v309 = vld [vmem:[%s2] sm:$0x1]
        %v311 = vperm.slane %v309, 0
        %v313 = vadd.f32 %v308, %v311
        %v314 = vld [vmem:[#allocation7] sm:$0xff]
        %v315 = vld [vmem:[#allocation7 + $0x8] sm:$0xff]
        %v316 = vld [vmem:[#allocation7 + $0x10] sm:$0xff]
        %v317 = vld [vmem:[#allocation7 + $0x18] sm:$0xff]
        %v318 = vld [vmem:[#allocation7 + $0x20] sm:$0xff]
        %v319 = vld [vmem:[#allocation7 + $0x28] sm:$0xff]
        %v320 = vld [vmem:[#allocation7 + $0x30] sm:$0xff]
        %v321 = vld [vmem:[#allocation7 + $0x38] sm:$0xff]
        %v322 = vld [vmem:[#allocation7 + $0x40] sm:$0xff]
        %v323 = vld [vmem:[#allocation7 + $0x48] sm:$0xff]
        %v324 = vld [vmem:[#allocation7 + $0x50] sm:$0xff]
        %v325 = vld [vmem:[#allocation7 + $0x58] sm:$0xff]
        %v326 = vld [vmem:[#allocation7 + $0x60] sm:$0xff]
        %v327 = vld [vmem:[#allocation7 + $0x68] sm:$0xff]
        %v328 = vld [vmem:[#allocation7 + $0x70] sm:$0xff]
        %v329 = vld [vmem:[#allocation7 + $0x78] sm:$0xff]
        %v330 = vld [vmem:[%s4] sm:$0x1]
        %v332 = vperm.slane %v330, 0
        %334 = vmatpush.msra.mxu0 %v329
        %335 = vmatpush.msra.mxu0 %v328
        %336 = vmatpush.msra.mxu0 %v327
        %337 = vmatpush.msra.mxu0 %v326
        %338 = vmatpush.msra.mxu0 %v325
        %339 = vmatpush.msra.mxu0 %v324
        %340 = vmatpush.msra.mxu0 %v323
        %341 = vmatpush.msra.mxu0 %v322
        %342 = vmatpush.msra.mxu0 %v321
        %343 = vmatpush.msra.mxu0 %v320
        %344 = vmatpush.msra.mxu0 %v319
        %345 = vmatpush.msra.mxu0 %v318
        %346 = vmatpush.msra.mxu0 %v317
        %347 = vmatpush.msra.mxu0 %v316
        %348 = vmatpush.msra.mxu0 %v315
        %349 = vmatpush.msra.mxu0 %v314
        %350 = vmatmul.f32.gmra.mxu0 %v313
        %v351 = vpop.f32.mrf.mxu0
        %v352 = vadd.f32 %v332, %v351
        %353 = vdwg.mxu0
        %v354 = vadd.f32 %v273, %v352
        %355 = vst [vmem:[%s272] sm:$0xff] %v354
        %s356 = sand.u32 %s141, 1
        %s357 = scalar_lea.sflag [#allocation4], %s356
        %s358 = sand.u32 %s141, 1
        %s359 = smul.addr %s358, 8
        %s360 = scalar_lea.vmem [#allocation8], %s359
        // Predicated region
        $region53: #{_impl.1} parent=39 // pred_check
          %p361 = pneg %p151
        $region54: #{_impl.1} parent=39 // pred_check_branch
          %363 = sbr.rel (%p361) target = $region56
        $region55: #{_impl.1} parent=39 // pred_region
          %365 = vsyncadd %s357, 0
          %s366 = smul.addr %s23, 8
          %s367 = scalar_lea.hbm %s5, %s366
          %s369 = sshll.u32 %s360, 4
          %s370 = int_to_ptr.vmem [resolvable:$true] %s369
          %s371 = sshll.u32 %s367, 4
          %s372 = int_to_ptr.hbm [resolvable:$true] %s371
          %374 = dma.vmem_to_hbm [thread:$0]  %s370, 128, %s372, %s357
        $region56: #{_impl.1} parent=39 // pred_fallthru
          _
      $region40: #{_impl.1} parent=5 // pred_fallthru
        _
      %p375 = scmp.le.s32.totalorder 2, %s18
      // Predicated region
      $region57: #{_impl.1} parent=5 // pred_check
        %p376 = pneg %p375
      $region58: #{_impl.1} parent=5 // pred_check_branch
        %378 = sbr.rel (%p376) target = $region60
      $region59: #{_impl.1} parent=5 // pred_region
        %s379 = ssub.s32 %s18, 2
        // Predicated region
        $region61: #{_impl.1} parent=59 // pred_check
          %p380 = pneg %p157
        $region62: #{_impl.1} parent=59 // pred_check_branch
          %382 = sbr.rel (%p380) target = $region64
        $region63: #{_impl.1} parent=59 // pred_region
          %s383 = sand.u32 %s142, 1
          %s384 = scalar_lea.sflag [#allocation4], %s383
          %s385 = sand.u32 %s142, 1
          %s386 = smul.addr %s385, 8
          %s387 = scalar_lea.vmem [#allocation8], %s386
          %389 = dma.done %s384, 128
        $region64: #{_impl.1} parent=59 // pred_fallthru
          _
      $region60: #{_impl.1} parent=5 // pred_fallthru
        _
    $region6: #{_impl.1} parent=1 // loop_footer
      %s22 = sadd.s32 1, %s18
    $region7: #{_impl.1} parent=1 // loop_footer_branch
      %17 = sbr.rel target = $region3
    $region8: #{_impl.1} parent=1 // loop_exit
      _
    %390 = vsyncpa [#allocation3], 1
    %s391 = scalar_lea.sflag [#allocation3], 1
    %392 = vsyncpa %s391, 1
    %393 = vsyncpa [#allocation6], 1
    %394 = vsyncpa [#allocation4], 1
    %s395 = scalar_lea.sflag [#allocation4], 1
    %396 = vsyncpa %s395, 1

// kernel: _impl.1
$region0: #{_impl.1}
  #allocation0 [shape = 'u32[]', space=smem, size = 0x4, offset = 0x4, fixed_abs, tag = 'smem constant byte address 0x4 - core index']
  #allocation1 [shape = 'u32[72,128]{1,0:T(1,128)}', space=vmem, size = 0x9000, scoped, tag = 'internal scratch']
  %s0 = inlined_call_operand.hbm [shape: f32[16,128], index: 0, kind: input, shape index: {}]
  %s1 = inlined_call_operand.hbm [shape: f32[1,128], index: 1, kind: input, shape index: {}]
  %s2 = inlined_call_operand.vmem [shape: f32[1,128], index: 2, kind: input, shape index: {}]
  %s3 = inlined_call_operand.hbm [shape: f32[128,128], index: 3, kind: input, shape index: {}]
  %s4 = inlined_call_operand.vmem [shape: f32[1,128], index: 4, kind: input, shape index: {}]
  %s5 = inlined_call_operand.hbm [shape: f32[16,128], index: 5, kind: output, shape index: {}]
  %s6 = sld [smem:[#allocation0]]
  $region65: #{_impl.1} parent=0
    _
  %s8 = ssub.s32 1, %s6
  %s9 = scalar_select 0, %s8, %s6
  $region1: #{_impl.1} parent=0
    #allocation2 [shape = 'u8[8192]{0}', space=vmem, size = 0x2000, scoped, tag = 'input window, operand 0']
    #allocation3 [shape = 's32[2]{0}', space=sflag, size = 0x8, scoped, tag = 'scoped memory for _impl.1']
    #allocation4 [shape = 's32[2]{0}', space=sflag, size = 0x8, scoped, tag = 'scoped memory for _impl.1']
    #allocation5 [shape = 'u8[512]{0}', space=vmem, size = 0x400, scoped, tag = 'input window, operand 1, single buffered']
    #allocation6 [shape = 's32[1]{0}', space=sflag, size = 0x4, scoped, tag = 'scoped memory for _impl.1']
    #allocation7 [shape = 'u8[65536]{0}', space=vmem, size = 0x10000, scoped, tag = 'input window, operand 3, single buffered']
    #allocation8 [shape = 'u8[8192]{0}', space=vmem, size = 0x2000, scoped, tag = 'output window, operand 0']
    %10 = vsyncpa [#allocation3], 0
    %s11 = scalar_lea.sflag [#allocation3], 1
    %12 = vsyncpa %s11, 0
    %13 = vsyncpa [#allocation6], 0
    %14 = vsyncpa [#allocation4], 0
    %s15 = scalar_lea.sflag [#allocation4], 1
    %16 = vsyncpa %s15, 0
    loop: start=0, step=1, limit=4
    $region2: #{_impl.1} parent=1 // loop_pre_header
      _
    $region3: #{_impl.1} parent=1 // loop_header
      %s18 = sphi 0, %s22
      %p19 = scmp.ge.s32.totalorder %s18, 4
      %s28 = sphi 0, %s30
      %s31 = sphi 0, %s28
      %s32 = sphi 0, %s31
      %s48 = sphi 0, %s32
      %s52 = sphi 0, %s52
      %s54 = sphi 0, %s52
      %s55 = sphi 0, %s54
      %s69 = sphi 0, %s55
      %s73 = sphi 0, %s73
      %s75 = sphi 0, %s73
      %s76 = sphi 0, %s75
      %s90 = sphi 0, %s76
      %s94 = sphi 0, %s94
      %s96 = sphi 0, %s94
      %s97 = sphi 0, %s96
      %s111 = sphi 0, %s97
      %s115 = sphi 0, %s115
      %s117 = sphi 0, %s115
      %s118 = sphi 0, %s117
      %s132 = sphi 0, %s118
      %s138 = sphi 0, %s140
      %s141 = sphi 0, %s138
      %s142 = sphi 0, %s141
      %s158 = sphi 0, %s142
    $region4: #{_impl.1} parent=1 // loop_header_branch
      %21 = sbr.rel (%p19) target = $region8
    $region5: #{_impl.1} parent=1 // loop_body
      %s23 = ssub.s32 %s18, 1
      %s24 = ssub.s32 %s18, 2
      %s25 = sadd.s32 %s18, 1
      %s26 = ssub.s32 %s18, %s25
      %p27 = scmp.eq.s32.totalorder %s26, 0
      %s29 = sadd.s32 %s28, 1
      %s30 = scalar_select %p27, %s28, %s29
      %p33 = pneg %p27
      %p34 = scmp.eq.s32.totalorder %s18, 1
      %p35 = por %p33, %p34
      %p36 = scmp.ne.s32.totalorder %s28, %s31
      %p37 = scmp.eq.s32.totalorder %s18, 0
      %p38 = por %p36, %p37
      %p39 = scmp.ne.s32.totalorder %s28, %s31
      %p40 = scmp.eq.s32.totalorder %s23, 1
      %p41 = por %p39, %p40
      %p42 = scmp.ne.s32.totalorder %s31, %s32
      %p43 = scmp.eq.s32.totalorder %s23, 0
      %p44 = por %p42, %p43
      %p45 = scmp.ne.s32.totalorder %s31, %s32
      %p46 = scmp.eq.s32.totalorder %s24, 1
      %p47 = por %p45, %p46
      %p49 = scmp.ne.s32.totalorder %s32, %s48
      %p50 = scmp.eq.s32.totalorder %s24, 0
      %p51 = por %p49, %p50
      %s53 = sadd.s32 %s52, 1
      %p56 = scmp.eq.s32.totalorder %s18, 1
      %p57 = scmp.ne.s32.totalorder %s52, %s54
      %p58 = scmp.eq.s32.totalorder %s18, 0
      %p59 = por %p57, %p58
      %p60 = scmp.ne.s32.totalorder %s52, %s54
      %p61 = scmp.eq.s32.totalorder %s23, 1
      %p62 = por %p60, %p61
      %p63 = scmp.ne.s32.totalorder %s54, %s55
      %p64 = scmp.eq.s32.totalorder %s23, 0
      %p65 = por %p63, %p64
      %p66 = scmp.ne.s32.totalorder %s54, %s55
      %p67 = scmp.eq.s32.totalorder %s24, 1
      %p68 = por %p66, %p67
      %p70 = scmp.ne.s32.totalorder %s55, %s69
      %p71 = scmp.eq.s32.totalorder %s24, 0
      %p72 = por %p70, %p71
      %s74 = sadd.s32 %s73, 1
      %p77 = scmp.eq.s32.totalorder %s18, 1
      %p78 = scmp.ne.s32.totalorder %s73, %s75
      %p79 = scmp.eq.s32.totalorder %s18, 0
      %p80 = por %p78, %p79
      %p81 = scmp.ne.s32.totalorder %s73, %s75
      %p82 = scmp.eq.s32.totalorder %s23, 1
      %p83 = por %p81, %p82
      %p84 = scmp.ne.s32.totalorder %s75, %s76
      %p85 = scmp.eq.s32.totalorder %s23, 0
      %p86 = por %p84, %p85
      %p87 = scmp.ne.s32.totalorder %s75, %s76
      %p88 = scmp.eq.s32.totalorder %s24, 1
      %p89 = por %p87, %p88
      %p91 = scmp.ne.s32.totalorder %s76, %s90
      %p92 = scmp.eq.s32.totalorder %s24, 0
      %p93 = por %p91, %p92
      %s95 = sadd.s32 %s94, 1
      %p98 = scmp.eq.s32.totalorder %s18, 1
      %p99 = scmp.ne.s32.totalorder %s94, %s96
      %p100 = scmp.eq.s32.totalorder %s18, 0
      %p101 = por %p99, %p100
      %p102 = scmp.ne.s32.totalorder %s94, %s96
      %p103 = scmp.eq.s32.totalorder %s23, 1
      %p104 = por %p102, %p103
      %p105 = scmp.ne.s32.totalorder %s96, %s97
      %p106 = scmp.eq.s32.totalorder %s23, 0
      %p107 = por %p105, %p106
      %p108 = scmp.ne.s32.totalorder %s96, %s97
      %p109 = scmp.eq.s32.totalorder %s24, 1
      %p110 = por %p108, %p109
      %p112 = scmp.ne.s32.totalorder %s97, %s111
      %p113 = scmp.eq.s32.totalorder %s24, 0
      %p114 = por %p112, %p113
      %s116 = sadd.s32 %s115, 1
      %p119 = scmp.eq.s32.totalorder %s18, 1
      %p120 = scmp.ne.s32.totalorder %s115, %s117
      %p121 = scmp.eq.s32.totalorder %s18, 0
      %p122 = por %p120, %p121
      %p123 = scmp.ne.s32.totalorder %s115, %s117
      %p124 = scmp.eq.s32.totalorder %s23, 1
      %p125 = por %p123, %p124
      %p126 = scmp.ne.s32.totalorder %s117, %s118
      %p127 = scmp.eq.s32.totalorder %s23, 0
      %p128 = por %p126, %p127
      %p129 = scmp.ne.s32.totalorder %s117, %s118
      %p130 = scmp.eq.s32.totalorder %s24, 1
      %p131 = por %p129, %p130
      %p133 = scmp.ne.s32.totalorder %s118, %s132
      %p134 = scmp.eq.s32.totalorder %s24, 0
      %p135 = por %p133, %p134
      %s136 = ssub.s32 %s18, %s25
      %p137 = scmp.eq.s32.totalorder %s136, 0
      %s139 = sadd.s32 %s138, 1
      %s140 = scalar_select %p137, %s138, %s139
      %p143 = pneg %p137
      %p144 = scmp.eq.s32.totalorder %s18, 1
      %p145 = por %p143, %p144
      %p146 = scmp.ne.s32.totalorder %s138, %s141
      %p147 = scmp.eq.s32.totalorder %s18, 0
      %p148 = por %p146, %p147
      %p149 = scmp.ne.s32.totalorder %s138, %s141
      %p150 = scmp.eq.s32.totalorder %s23, 1
      %p151 = por %p149, %p150
      %p152 = scmp.ne.s32.totalorder %s141, %s142
      %p153 = scmp.eq.s32.totalorder %s23, 0
      %p154 = por %p152, %p153
      %p155 = scmp.ne.s32.totalorder %s141, %s142
      %p156 = scmp.eq.s32.totalorder %s24, 1
      %p157 = por %p155, %p156
      %p159 = scmp.ne.s32.totalorder %s142, %s158
      %p160 = scmp.eq.s32.totalorder %s24, 0
      %p161 = por %p159, %p160
      %p162 = scmp.le.s32.totalorder 1, %s18
      %p163 = scmp.lt.s32.totalorder %s18, 3
      %p164 = pnand %p162, %p163
      %p165 = pneg %p164
      // Predicated region
      $region9: #{_impl.1} parent=5 // pred_check
        _
      $region10: #{_impl.1} parent=5 // pred_check_branch
        %167 = sbr.rel (%p164) target = $region12
      $region11: #{_impl.1} parent=5 // pred_region
        %s168 = ssub.s32 %s18, 1
        // Predicated region
        $region13: #{_impl.1} parent=11 // pred_check
          %p169 = pneg %p65
        $region14: #{_impl.1} parent=11 // pred_check_branch
          %171 = sbr.rel (%p169) target = $region16
        $region15: #{_impl.1} parent=11 // pred_region
          %173 = vsyncadd [#allocation6], 0
          %s175 = sshll.u32 %s1, 4
          %s176 = int_to_ptr.hbm [resolvable:$true] %s175
          %s177 = sshll.u32 [#allocation5], 4
          %s178 = int_to_ptr.vmem [resolvable:$true] %s177
          %180 = dma.hbm_to_vmem [thread:$0]  %s176, 16, %s178, [#allocation6]
        $region16: #{_impl.1} parent=11 // pred_fallthru
          _
        // Predicated region
        $region17: #{_impl.1} parent=11 // pred_check
          %p181 = pneg %p86
        $region18: #{_impl.1} parent=11 // pred_check_branch
          %183 = sbr.rel (%p181) target = $region20
        $region19: #{_impl.1} parent=11 // pred_region
          _
        $region20: #{_impl.1} parent=11 // pred_fallthru
          _
        // Predicated region
        $region21: #{_impl.1} parent=11 // pred_check
          %p184 = pneg %p107
        $region22: #{_impl.1} parent=11 // pred_check_branch
          %186 = sbr.rel (%p184) target = $region24
        $region23: #{_impl.1} parent=11 // pred_region
          %188 = vsyncadd [#allocation6], 0
          %s189 = sshll.u32 %s3, 4
          %s190 = int_to_ptr.hbm [resolvable:$true] %s189
          %s191 = sshll.u32 [#allocation7], 4
          %s192 = int_to_ptr.vmem [resolvable:$true] %s191
          %197 = dma.hbm_to_vmem [thread:$0]  %s190, 2048, %s192, [#allocation6], 128, 128, 8
        $region24: #{_impl.1} parent=11 // pred_fallthru
          _
        // Predicated region
        $region25: #{_impl.1} parent=11 // pred_check
          %p198 = pneg %p128
        $region26: #{_impl.1} parent=11 // pred_check_branch
          %200 = sbr.rel (%p198) target = $region28
        $region27: #{_impl.1} parent=11 // pred_region
          _
        $region28: #{_impl.1} parent=11 // pred_fallthru
          _
      $region12: #{_impl.1} parent=5 // pred_fallthru
        _
      %p201 = scmp.lt.s32.totalorder %s18, 2
      // Predicated region
      $region29: #{_impl.1} parent=5 // pred_check
        %p202 = pneg %p201
      $region30: #{_impl.1} parent=5 // pred_check_branch
        %204 = sbr.rel (%p202) target = $region32
      $region31: #{_impl.1} parent=5 // pred_region
        // Predicated region
        $region33: #{_impl.1} parent=31 // pred_check
          %p205 = pneg %p38
        $region34: #{_impl.1} parent=31 // pred_check_branch
          %207 = sbr.rel (%p205) target = $region36
        $region35: #{_impl.1} parent=31 // pred_region
          %s208 = sand.u32 %s28, 1
          %s209 = scalar_lea.sflag [#allocation3], %s208
          %s210 = sand.u32 %s28, 1
          %s211 = smul.addr %s210, 8
          %s212 = scalar_lea.vmem [#allocation2], %s211
          %214 = vsyncadd %s209, 0
          %s215 = smul.addr %s18, 8
          %s216 = scalar_lea.hbm %s0, %s215
          %s218 = sshll.u32 %s216, 4
          %s219 = int_to_ptr.hbm [resolvable:$true] %s218
          %s220 = sshll.u32 %s212, 4
          %s221 = int_to_ptr.vmem [resolvable:$true] %s220
          %223 = dma.hbm_to_vmem [thread:$0]  %s219, 128, %s221, %s209
        $region36: #{_impl.1} parent=31 // pred_fallthru
          _
      $region32: #{_impl.1} parent=5 // pred_fallthru
        _
      %p224 = scmp.le.s32.totalorder 1, %s18
      %p225 = scmp.lt.s32.totalorder %s18, 3
      %p226 = pnand %p224, %p225
      %p227 = pneg %p226
      // Predicated region
      $region37: #{_impl.1} parent=5 // pred_check
        _
      $region38: #{_impl.1} parent=5 // pred_check_branch
        %229 = sbr.rel (%p226) target = $region40
      $region39: #{_impl.1} parent=5 // pred_region
        %s230 = ssub.s32 %s18, 1
        %s231 = sand.u32 %s31, 1
        %s232 = scalar_lea.sflag [#allocation3], %s231
        %s233 = sand.u32 %s31, 1
        %s234 = smul.addr %s233, 8
        %s235 = scalar_lea.vmem [#allocation2], %s234
        // Predicated region
        $region41: #{_impl.1} parent=39 // pred_check
          %p236 = pneg %p44
        $region42: #{_impl.1} parent=39 // pred_check_branch
          %238 = sbr.rel (%p236) target = $region44
        $region43: #{_impl.1} parent=39 // pred_region
          %240 = dma.done %s232, 128
        $region44: #{_impl.1} parent=39 // pred_fallthru
          _
        // Predicated region
        $region45: #{_impl.1} parent=39 // pred_check
          %p241 = pneg %p65
        $region46: #{_impl.1} parent=39 // pred_check_branch
          %243 = sbr.rel (%p241) target = $region48
        $region47: #{_impl.1} parent=39 // pred_region
          %245 = dma.done [#allocation6], 16
        $region48: #{_impl.1} parent=39 // pred_fallthru
          _
        // Predicated region
        $region49: #{_impl.1} parent=39 // pred_check
          %p246 = pneg %p107
        $region50: #{_impl.1} parent=39 // pred_check_branch
          %248 = sbr.rel (%p246) target = $region52
        $region51: #{_impl.1} parent=39 // pred_region
          %250 = dma.done [#allocation6], 2048
        $region52: #{_impl.1} parent=39 // pred_fallthru
          _
        %s251 = sand.u32 %s31, 1
        %s252 = scalar_lea.sflag [#allocation3], %s251
        %s253 = sand.u32 %s31, 1
        %s254 = smul.addr %s253, 8
        %s255 = scalar_lea.vmem [#allocation2], %s254
        %p256 = pneg %p44
        %p257 = pneg %p41
        %p258 = pneg %p65
        %p259 = pneg %p62
        %p260 = pneg %p86
        %p261 = pneg %p83
        %p262 = pneg %p107
        %p263 = pneg %p104
        %p264 = pneg %p128
        %p265 = pneg %p125
        %p266 = pneg %p154
        %p267 = pneg %p151
        %s268 = sand.u32 %s141, 1
        %s269 = scalar_lea.sflag [#allocation4], %s268
        %s270 = sand.u32 %s141, 1
        %s271 = smul.addr %s270, 8
        %s272 = scalar_lea.vmem [#allocation8], %s271
        %v273 = vld [vmem:[%s235] sm:$0xff]
        %274 = vadd.xlane.f32.xlu0 %v273
        %v275 = vpop.xlane.xlu0 %274
        %v276 = vrcp.pop 128.0
        %v277 = vmul.f32 128.0, %v276
        %v278 = vsub.f32 1.0, %v277
        %v279 = vmul.f32 %v276, %v278
        %v280 = vadd.f32 %v276, %v279
        %vm281 = vweird.f32 %v276
        %v282 = vsel %vm281, %v276, %v280
        %v283 = vmul.f32 %v275, %v282
        %v284 = vsub.f32 %v273, %v283
        %v285 = vmul.f32 %v284, %v284
        %286 = vadd.xlane.f32.xlu0 %v285
        %v287 = vpop.xlane.xlu0 %286
        %v288 = vmul.f32 %v287, 0.007874016
        %v289 = vrsqrt.pop %v288
        %v290 = vmul.f32 %v289, %v288
        %v291 = vmul.f32 %v290, %v289
        %v292 = vmul.f32 0.5, %v291
        %v293 = vsub.f32 1.5, %v292
        %v294 = vmul.f32 %v289, %v293
        %v295 = vmul.f32 %v288, %v294
        %vm296 = vcmp.eq.f32.partialorder %v288, inf
        %v297 = vsel %vm296, %v288, %v295
        %vm298 = vcmp.eq.f32.partialorder %v288, 0.0
        %v299 = vand.u32 %v288, 2147483648
        %v300 = vsel %vm298, %v299, %v297
        %v301 = vadd.f32 %v300, 1e-06
        %v302 = vrcp.pop %v301
        %v303 = vmul.f32 %v284, %v302
        %v304 = vld [vmem:[#allocation5] sm:$0x1]
        %v306 = vperm.slane %v304, 0
        %v308 = vmul.f32 %v303, %v306
        %v309 = vld [vmem:[%s2] sm:$0x1]
        %v311 = vperm.slane %v309, 0
        %v313 = vadd.f32 %v308, %v311
        %v314 = vld [vmem:[#allocation7] sm:$0xff]
        %v315 = vld [vmem:[#allocation7 + $0x8] sm:$0xff]
        %v316 = vld [vmem:[#allocation7 + $0x10] sm:$0xff]
        %v317 = vld [vmem:[#allocation7 + $0x18] sm:$0xff]
        %v318 = vld [vmem:[#allocation7 + $0x20] sm:$0xff]
        %v319 = vld [vmem:[#allocation7 + $0x28] sm:$0xff]
        %v320 = vld [vmem:[#allocation7 + $0x30] sm:$0xff]
        %v321 = vld [vmem:[#allocation7 + $0x38] sm:$0xff]
        %v322 = vld [vmem:[#allocation7 + $0x40] sm:$0xff]
        %v323 = vld [vmem:[#allocation7 + $0x48] sm:$0xff]
        %v324 = vld [vmem:[#allocation7 + $0x50] sm:$0xff]
        %v325 = vld [vmem:[#allocation7 + $0x58] sm:$0xff]
        %v326 = vld [vmem:[#allocation7 + $0x60] sm:$0xff]
        %v327 = vld [vmem:[#allocation7 + $0x68] sm:$0xff]
        %v328 = vld [vmem:[#allocation7 + $0x70] sm:$0xff]
        %v329 = vld [vmem:[#allocation7 + $0x78] sm:$0xff]
        %v330 = vld [vmem:[%s4] sm:$0x1]
        %v332 = vperm.slane %v330, 0
        %334 = vmatpush.msra.mxu0 %v329
        %335 = vmatpush.msra.mxu0 %v328
        %336 = vmatpush.msra.mxu0 %v327
        %337 = vmatpush.msra.mxu0 %v326
        %338 = vmatpush.msra.mxu0 %v325
        %339 = vmatpush.msra.mxu0 %v324
        %340 = vmatpush.msra.mxu0 %v323
        %341 = vmatpush.msra.mxu0 %v322
        %342 = vmatpush.msra.mxu0 %v321
        %343 = vmatpush.msra.mxu0 %v320
        %344 = vmatpush.msra.mxu0 %v319
        %345 = vmatpush.msra.mxu0 %v318
        %346 = vmatpush.msra.mxu0 %v317
        %347 = vmatpush.msra.mxu0 %v316
        %348 = vmatpush.msra.mxu0 %v315
        %349 = vmatpush.msra.mxu0 %v314
        %350 = vmatmul.f32.gmra.mxu0 %v313
        %v351 = vpop.f32.mrf.mxu0
        %v352 = vadd.f32 %v332, %v351
        %353 = vdwg.mxu0
        %v354 = vadd.f32 %v273, %v352
        %355 = vst [vmem:[%s272] sm:$0xff] %v354
        %s356 = sand.u32 %s141, 1
        %s357 = scalar_lea.sflag [#allocation4], %s356
        %s358 = sand.u32 %s141, 1
        %s359 = smul.addr %s358, 8
        %s360 = scalar_lea.vmem [#allocation8], %s359
        // Predicated region
        $region53: #{_impl.1} parent=39 // pred_check
          %p361 = pneg %p151
        $region54: #{_impl.1} parent=39 // pred_check_branch
          %363 = sbr.rel (%p361) target = $region56
        $region55: #{_impl.1} parent=39 // pred_region
          %365 = vsyncadd %s357, 0
          %s366 = smul.addr %s23, 8
          %s367 = scalar_lea.hbm %s5, %s366
          %s369 = sshll.u32 %s360, 4
          %s370 = int_to_ptr.vmem [resolvable:$true] %s369
          %s371 = sshll.u32 %s367, 4
          %s372 = int_to_ptr.hbm [resolvable:$true] %s371
          %374 = dma.vmem_to_hbm [thread:$0]  %s370, 128, %s372, %s357
        $region56: #{_impl.1} parent=39 // pred_fallthru
          _
      $region40: #{_impl.1} parent=5 // pred_fallthru
        _
      %p375 = scmp.le.s32.totalorder 2, %s18
      // Predicated region
      $region57: #{_impl.1} parent=5 // pred_check
        %p376 = pneg %p375
      $region58: #{_impl.1} parent=5 // pred_check_branch
        %378 = sbr.rel (%p376) target = $region60
      $region59: #{_impl.1} parent=5 // pred_region
        %s379 = ssub.s32 %s18, 2
        // Predicated region
        $region61: #{_impl.1} parent=59 // pred_check
          %p380 = pneg %p157
        $region62: #{_impl.1} parent=59 // pred_check_branch
          %382 = sbr.rel (%p380) target = $region64
        $region63: #{_impl.1} parent=59 // pred_region
          %s383 = sand.u32 %s142, 1
          %s384 = scalar_lea.sflag [#allocation4], %s383
          %s385 = sand.u32 %s142, 1
          %s386 = smul.addr %s385, 8
          %s387 = scalar_lea.vmem [#allocation8], %s386
          %389 = dma.done %s384, 128
        $region64: #{_impl.1} parent=59 // pred_fallthru
          _
      $region60: #{_impl.1} parent=5 // pred_fallthru
        _
    $region6: #{_impl.1} parent=1 // loop_footer
      %s22 = sadd.s32 1, %s18
    $region7: #{_impl.1} parent=1 // loop_footer_branch
      %17 = sbr.rel target = $region3
    $region8: #{_impl.1} parent=1 // loop_exit
      _
    %390 = vsyncpa [#allocation3], 1
    %s391 = scalar_lea.sflag [#allocation3], 1
    %392 = vsyncpa %s391, 1
    %393 = vsyncpa [#allocation6], 1
    %394 = vsyncpa [#allocation4], 1
    %s395 = scalar_lea.sflag [#allocation4], 1
    %396 = vsyncpa %s395, 1

</llo_original>
